<compile_context>
chip_gen: v5e
topology: v5e:2x2
jax: 0.10.0
libtpu: 0.0.40
codegen_flags: <defaults>
</compile_context>

<pallas_src>
import jax
import jax.numpy as jnp
from jax.experimental import pallas as pl
from jax.experimental.pallas import tpu as pltpu

GN_EPS = 1e-5
_VMEM_LIMIT = 32 * 1024 * 1024   # explicit scoped-VMEM cap, safe on v5e/v6e/v7x
_ACC_LANES = 128                 # lane-dense scatter accumulator width


def _round_up(x, m):
    return ((x + m - 1) // m) * m


def _group_avg_projector(num_channels, num_groups):
    """(C, C) bf16 projector: dot(y, P) = per-row group means (0/0.25 exact)."""
    gsize = num_channels // num_groups
    gid = jnp.arange(num_channels) // gsize
    p = (gid[:, None] == gid[None, :]).astype(jnp.float32) / float(gsize)
    return p.astype(jnp.bfloat16)


def _unique_rows(coords):
    """Static-shape unique rows (padded to M); returns (uniq, inv, n_unique)."""
    m = coords.shape[0]
    uniq, inv = jnp.unique(coords, axis=0, return_inverse=True, size=m)
    inv = inv.reshape(-1).astype(jnp.int32)
    return uniq, inv, jnp.max(inv) + 1


# ---------------------------------------------------------------------------
# Pallas kernel: pointwise linear (packed over kernel offsets) fused with GN
# ---------------------------------------------------------------------------
def _linear_gn_kernel(x_ref, w_ref, p_ref, gamma_ref, beta_ref, o_ref):
    """x:(TM,Cin) bf16  w:(Cin,Fp) bf16  p:(Fp,Fp) bf16  gamma/beta:(1,Fp) f32
    o:(TM,Fp) bf16.  GN stats: mean via one lane-dense bf16 matmul against the
    group-averaging projector; variance from centered values (no cancellation).
    All statistic math accumulates in f32."""
    y = jnp.dot(x_ref[...], w_ref[...], preferred_element_type=jnp.float32)
    p = p_ref[...]
    mean = jnp.dot(y.astype(jnp.bfloat16), p, preferred_element_type=jnp.float32)
    d = y - mean
    var = jnp.dot((d * d).astype(jnp.bfloat16), p,
                  preferred_element_type=jnp.float32)
    y_hat = d * jax.lax.rsqrt(var + GN_EPS)
    o_ref[...] = (y_hat * gamma_ref[...] + beta_ref[...]).astype(o_ref.dtype)


def linear_groupnorm(x, w, p, gamma, beta, *, tm=2048):
    """x:(N,Cin), w:(Cin,Fp) bf16, p:(Fp,Fp) bf16 -> (N,Fp) bf16.

    Fp = F for the 1x1x1 SubMConv3d; Fp = 8*F (all transposed-conv kernel
    offsets packed into the lane dimension -> lane-dense 256-wide output).
    Row-tiled over N ('parallel' grid axis -> shards across TensorCores)."""
    n, cin = x.shape
    fp = w.shape[1]
    tm = min(tm, _round_up(n, 16))            # multiple of 16 (bf16 sublanes)
    n_pad = _round_up(n, tm)

    xb = x.astype(jnp.bfloat16)
    if n_pad != n:
        xb = jnp.pad(xb, ((0, n_pad - n), (0, 0)))

    out = pl.pallas_call(
        _linear_gn_kernel,
        out_shape=jax.ShapeDtypeStruct((n_pad, fp), jnp.bfloat16),
        grid=(n_pad // tm,),
        in_specs=[
            pl.BlockSpec((tm, cin), lambda i: (i, 0)),
            pl.BlockSpec((cin, fp), lambda i: (0, 0)),
            pl.BlockSpec((fp, fp), lambda i: (0, 0)),
            pl.BlockSpec((1, fp), lambda i: (0, 0)),
            pl.BlockSpec((1, fp), lambda i: (0, 0)),
        ],
        out_specs=pl.BlockSpec((tm, fp), lambda i: (i, 0)),
        compiler_params=pltpu.CompilerParams(
            dimension_semantics=("parallel",),
            vmem_limit_bytes=_VMEM_LIMIT),
    )(xb, w, p, gamma, beta)
    return out[:n] if n_pad != n else out


# ---------------------------------------------------------------------------
# Pallas kernel: sort-based segment mean (scatter_mean over duplicate coords)
# ---------------------------------------------------------------------------
def _scatter_mean_kernel(bases_ref, inv_ref, feat_ref, o_ref, acc_ref):
    """bases:(n_tiles,) SMEM int32 (8-aligned per-tile base unique id)
    inv:(1,TM) int32 sorted unique ids (-1 = padding)   feat:(TM,F) bf16
    o:(U_out,F) f32 (written only on the last step)
    acc:(U_acc,128) f32 lane-dense VMEM accumulator, resident across the grid.
    """
    step = pl.program_id(0)
    n_steps = pl.num_programs(0)

    @pl.when(step == 0)
    def _():
        acc_ref[...] = jnp.zeros_like(acc_ref)

    tm, f = feat_ref.shape
    aw = acc_ref.shape[1]
    n_rows = tm + 8                              # covers the align-to-8 slack

    base = bases_ref[step]                       # scalar, multiple of 8
    base = pl.multiple_of(base, 8)

    # Local one-hot: rows sorted by id => ids within this tile span <= TM
    # values, so the one-hot is (TM+8, TM) instead of (U, TM).
    local = inv_ref[...] - base                                   # (1, tm)
    c_col = jax.lax.broadcasted_iota(jnp.int32, (n_rows, 1), 0)   # (n_rows, 1)
    onehot = (c_col == local).astype(jnp.bfloat16)                # (n_rows, tm)

    # Lane-dense augmented features [feat | 1 | 0 ... 0] -> (tm, 128); the
    # ones column makes the duplicate counts fall out of the same matmul.
    ft = feat_ref[...]
    lane = jax.lax.broadcasted_iota(jnp.int32, (tm, aw - f), 1)
    tail = (lane == 0).astype(ft.dtype)
    fa = jnp.concatenate([ft, tail], axis=1)                      # (tm, aw)

    partial = jnp.dot(onehot, fa, preferred_element_type=jnp.float32)
    acc_ref[pl.ds(base, n_rows), :] += partial

    @pl.when(step == n_steps - 1)
    def _():
        u_out = o_ref.shape[0]
        sums = acc_ref[0:u_out, 0:f]
        cnt = acc_ref[0:u_out, f:f + 1]
        o_ref[...] = sums / jnp.maximum(cnt, 1.0)    # exact divide


def scatter_mean(feats, inv, num_unique, *, tile_m=1024):
    """Mean of feats rows sharing the same inv index; static output (U_out, F)
    with U_out = round_up(num_unique, 8).  Rows past the true unique count are
    zero (count 0)."""
    m, f = feats.shape

    # Sort rows by unique id so segments are contiguous (O(M log M) on device).
    order = jnp.argsort(inv)
    s_inv = inv[order].astype(jnp.int32)
    s_feat = feats[order].astype(jnp.bfloat16)

    tm = min(tile_m, _round_up(m, 128))          # lane-aligned inv tiles
    m_pad = _round_up(m, tm)
    if m_pad != m:
        s_feat = jnp.pad(s_feat, ((0, m_pad - m), (0, 0)))
        s_inv = jnp.pad(s_inv, (0, m_pad - m), constant_values=-1)
    inv2d = s_inv.reshape(1, m_pad)
    n_tiles = m_pad // tm

    # Per-tile base unique id, clamped and rounded down to a sublane multiple.
    bases = jnp.maximum(s_inv[::tm], 0)
    bases = ((bases // 8) * 8).astype(jnp.int32)          # (n_tiles,)

    u_out = _round_up(num_unique, 8)
    u_acc = _round_up(num_unique + tm + 8, 8)             # base + TM+8 fits

    out = pl.pallas_call(
        _scatter_mean_kernel,
        out_shape=jax.ShapeDtypeStruct((u_out, f), jnp.float32),
        grid_spec=pltpu.PrefetchScalarGridSpec(
            num_scalar_prefetch=1,
            grid=(n_tiles,),
            in_specs=[
                pl.BlockSpec((1, tm), lambda i, bases: (0, i)),
                pl.BlockSpec((tm, f), lambda i, bases: (i, 0)),
            ],
            out_specs=pl.BlockSpec((u_out, f), lambda i, bases: (0, 0)),
            scratch_shapes=[pltpu.VMEM((u_acc, _ACC_LANES), jnp.float32)],
        ),
        compiler_params=pltpu.CompilerParams(
            dimension_semantics=("arbitrary",),           # reduction over M
            vmem_limit_bytes=_VMEM_LIMIT),
    )(bases, inv2d, s_feat)
    return out


# ---------------------------------------------------------------------------
# Module
# ---------------------------------------------------------------------------
class SparseFeaturePyramidPallas:
    """JAX/Pallas re-implementation of SparseFeaturePyramid.forward.

    With num_input_levels == num_encoder_levels == 3 the PyTorch
    lateral_convs / output_convs are empty and mask_feature is never used in
    forward(), so they are omitted."""

    def __init__(self, key, in_channels=(16, 24, 32), feat_channels=32,
                 num_groups=8, up_kernel_size=(2, 2, 2)):
        self.num_input_levels = len(in_channels)
        self.num_encoder_levels = 3
        self.feat_channels = feat_channels
        self.num_groups = num_groups
        self.up_kernel_size = up_kernel_size
        self.kvol = up_kernel_size[0] * up_kernel_size[1] * up_kernel_size[2]

        keys = jax.random.split(key, 8)
        kit = iter(keys)

        # Group-averaging projectors (block-diagonal for the packed transposed
        # conv); values 0 / 1/gsize = 0.25 are exact in bf16.
        self.p_in = _group_avg_projector(feat_channels, num_groups)
        self.p_up = _group_avg_projector(feat_channels * self.kvol,
                                         num_groups * self.kvol)

        # input_convs[i] consumes in_channels[num_input_levels - 1 - i]
        self.input_conv_w = []
        self.input_conv_gn = []
        for i in range(self.num_encoder_levels):
            cin = in_channels[self.num_input_levels - 1 - i]
            w = (jax.random.normal(next(kit), (cin, feat_channels), jnp.float32)
                 * 0.05).astype(jnp.bfloat16)
            self.input_conv_w.append(w)
            self.input_conv_gn.append(
                (jnp.ones((1, feat_channels), jnp.float32),
                 jnp.zeros((1, feat_channels), jnp.float32)))

        # Transposed-conv weights packed as (Cin, 8*F): column block o is the
        # (Cin, F) weight of kernel offset o.  gamma/beta pre-tiled to 8*F.
        self.up_w = []
        self.up_gn = []
        for _ in range(1, self.num_encoder_levels):
            w = (jax.random.normal(next(kit),
                                   (feat_channels, self.kvol * feat_channels),
                                   jnp.float32) * 0.05).astype(jnp.bfloat16)
            self.up_w.append(w)
            g = jnp.tile(jnp.ones((feat_channels,), jnp.float32), self.kvol)
            b = jnp.tile(jnp.zeros((feat_channels,), jnp.float32), self.kvol)
            self.up_gn.append((g.reshape(1, -1), b.reshape(1, -1)))

        offs = []
        for dz in range(up_kernel_size[0]):
            for dy in range(up_kernel_size[1]):
                for dx in range(up_kernel_size[2]):
                    offs.append((dz, dy, dx))
        self.offsets = jnp.array(offs, dtype=jnp.int32)                 # (8, 3)

    def forward(self, feats):
        # ------------------------------------------------------------------
        # 1) per-level 1x1x1 projection + GroupNorm (fused Pallas kernel)
        # ------------------------------------------------------------------
        outs_1 = []
        for i in range(self.num_encoder_levels):
            level_idx = self.num_input_levels - i - 1
            f = feats[level_idx]
            gamma, beta = self.input_conv_gn[i]
            proj = linear_groupnorm(f['features'], self.input_conv_w[i],
                                    self.p_in, gamma, beta)
            outs_1.append({'features': proj, 'indices': f['indices']})

        # ------------------------------------------------------------------
        # 2) downsample-and-fuse coordinates, unique + scatter_mean
        # ------------------------------------------------------------------
        last_feat = outs_1[-1]['features']
        last_bcoord = outs_1[-1]['indices']
        fused_feat, fused_bcoord = last_feat, last_bcoord
        for i in range(self.num_encoder_levels - 2, -1, -1):
            down = last_bcoord[:, 1:] // 2
            down_bcoord = jnp.concatenate([last_bcoord[:, 0:1], down], axis=1)
            fused_bcoord = jnp.concatenate([down_bcoord, outs_1[i]['indices']],
                                           axis=0)
            fused_feat = jnp.concatenate([last_feat, outs_1[i]['features']],
                                         axis=0)
            last_feat, last_bcoord = fused_feat, fused_bcoord

        _, inv, _ = _unique_rows(fused_bcoord)
        feat_new = scatter_mean(fused_feat, inv, fused_feat.shape[0])

        # ------------------------------------------------------------------
        # 3) broadcast averaged features back + residual add (plain jnp; XLA
        #    fuses the gather and the add).
        # ------------------------------------------------------------------
        up_feat = feat_new[inv]
        outs_2 = []
        for i in range(self.num_encoder_levels - 2, -1, -1):
            residual = outs_1[self.num_encoder_levels - 2 - i]
            n_cur = residual['indices'].shape[0]
            outs_2.append({'features': residual['features'] + up_feat[-n_cur:, :],
                           'indices': residual['indices']})
            up_feat = up_feat[:-n_cur, :]
        residual = outs_1[-1]
        outs_2.append({'features': residual['features'] + up_feat,
                       'indices': residual['indices']})

        # ------------------------------------------------------------------
        # 4) packed sparse transposed-conv upsample + GN, merge with finer
        #    level.  (k=2, s=2, p=0 => no overlapping outputs, so per-offset
        #    linear + per-row GN is exact; duplicates only arise against the
        #    finer level and are averaged, matching the reference.)
        #    Host syncs (int(n_unique)) are batched after all device work.
        # ------------------------------------------------------------------
        outs_d2t = [{'feat': outs_2[0]['features'],
                     'coord': outs_2[0]['indices'].astype(jnp.int32)}]
        pending = []
        for i in range(1, self.num_encoder_levels):
            prev = outs_2[i - 1]
            gamma, beta = self.up_gn[i - 1]
            up = linear_groupnorm(prev['features'], self.up_w[i - 1],
                                  self.p_up, gamma, beta)             # (Np, 8F)
            n_p = up.shape[0]
            up_flat = up.reshape(n_p * self.kvol, self.feat_channels)  # point-major
            base = prev['indices']
            base_rep = jnp.repeat(base, self.kvol, axis=0)             # (8Np, 4)
            offs = jnp.tile(self.offsets, (n_p, 1))                    # (8Np, 3)
            up_coords = jnp.concatenate(
                [base_rep[:, 0:1], base_rep[:, 1:] * 2 + offs], axis=1)

            sp_feats = jnp.concatenate([outs_2[i]['features'], up_flat], axis=0)
            sp_coords = jnp.concatenate([outs_2[i]['indices'], up_coords], axis=0)
            uniq, unq_inv, n_u = _unique_rows(sp_coords)
            feats_new = scatter_mean(sp_feats, unq_inv, sp_feats.shape[0])
            pending.append((feats_new, uniq, n_u))

        # All pallas_calls for both levels are enqueued; sync the counts now.
        for feats_new, uniq, n_u in pending:
            nu = int(n_u)     # data-dependent output size, as in the reference
            outs_d2t.append({'feat': feats_new[:nu],
                             'coord': uniq[:nu].astype(jnp.int32)})
        return outs_d2t


# ---------------------------------------------------------------------------
# Example inputs
# ---------------------------------------------------------------------------
def make_sparse_level(key, batch, grid_size, num_points, channels):
    """Random sparse voxel level: unique (batch, z, y, x) coords + features."""
    k1, k2 = jax.random.split(key)
    total = batch * grid_size ** 3
    lin = jax.random.permutation(k1, total)[:num_points]
    b = lin // grid_size ** 3
    rem = lin % grid_size ** 3
    z = rem // grid_size ** 2
    rem = rem % grid_size ** 2
    y = rem // grid_size
    x = rem % grid_size
    indices = jnp.stack([b, z, y, x], axis=1).astype(jnp.int32)
    features = jax.random.normal(k2, (num_points, channels), jnp.float32)
    return {'features': features, 'indices': indices}


if __name__ == "__main__":
    key = jax.random.PRNGKey(0)
    k_mod, k0, k1, k2 = jax.random.split(key, 4)

    in_channels = (16, 24, 32)
    feat_channels = 32
    model = SparseFeaturePyramidPallas(k_mod, in_channels=in_channels,
                                       feat_channels=feat_channels,
                                       num_groups=8)

    # level 0 = finest (16^3 grid), level 2 = coarsest (4^3 grid), batch = 2
    feats = [
        make_sparse_level(k0, 2, 16, 64, in_channels[0]),
        make_sparse_level(k1, 2, 8, 32, in_channels[1]),
        make_sparse_level(k2, 2, 4, 16, in_channels[2]),
    ]

    outs = model.forward(feats)
    ok = True
    for o in outs:
        f = jax.block_until_ready(o['feat'])
        jax.block_until_ready(o['coord'])
        ok = ok and bool(jnp.all(jnp.isfinite(f.astype(jnp.float32))))
    if ok:
        print("KERNEL_OK")
    else:
        print("KERNEL_FAILED: non-finite output")
</pallas_src>

<mosaic_0001>
module attributes {stable_mosaic.version = 11 : i64} {
  func.func @_linear_gn_kernel(%arg0: i32, %arg1: memref<16x32xbf16, #tpu.memory_space<vmem>>, %arg2: memref<32x32xbf16, #tpu.memory_space<vmem>>, %arg3: memref<32x32xbf16, #tpu.memory_space<vmem>>, %arg4: memref<1x32xf32, #tpu.memory_space<vmem>>, %arg5: memref<1x32xf32, #tpu.memory_space<vmem>>, %arg6: memref<16x32xbf16, #tpu.memory_space<vmem>>) attributes {dimension_semantics = [#tpu.dimension_semantics<parallel>], iteration_bounds = array<i64: 1>, scalar_prefetch = 0 : i64, scratch_operands = 0 : i64, tpu.core_type = #tpu.core_type<tc>, window_params = [{transform_indices = @transform_0, window_bounds = array<i64: 16, 32>}, {pipeline_mode = #tpu.pipeline_mode<synchronous>, transform_indices = @transform_1, window_bounds = array<i64: 32, 32>}, {pipeline_mode = #tpu.pipeline_mode<synchronous>, transform_indices = @transform_2, window_bounds = array<i64: 32, 32>}, {pipeline_mode = #tpu.pipeline_mode<synchronous>, transform_indices = @transform_3, window_bounds = array<i64: 1, 32>}, {pipeline_mode = #tpu.pipeline_mode<synchronous>, transform_indices = @transform_4, window_bounds = array<i64: 1, 32>}, {transform_indices = @transform_5, window_bounds = array<i64: 16, 32>}]} {
    %c0 = arith.constant 0 : index
    %c0_0 = arith.constant 0 : index
    %0 = vector.load %arg1[%c0, %c0_0] : memref<16x32xbf16, #tpu.memory_space<vmem>>, vector<16x32xbf16>
    %c0_1 = arith.constant 0 : index
    %c0_2 = arith.constant 0 : index
    %1 = vector.load %arg2[%c0_1, %c0_2] : memref<32x32xbf16, #tpu.memory_space<vmem>>, vector<32x32xbf16>
    %cst = arith.constant dense<0.000000e+00> : vector<16x32xf32>
    %2 = tpu.matmul %0, %1, %cst {dimension_numbers = #tpu.dot_dimension_numbers<[1], [0], [0], [1], [0, 0, 1, 1], [], []>} : vector<16x32xbf16>, vector<32x32xbf16>, vector<16x32xf32> -> vector<16x32xf32>
    %c0_3 = arith.constant 0 : index
    %c0_4 = arith.constant 0 : index
    %3 = vector.load %arg3[%c0_3, %c0_4] : memref<32x32xbf16, #tpu.memory_space<vmem>>, vector<32x32xbf16>
    %4 = arith.truncf %2 : vector<16x32xf32> to vector<16x32xbf16>
    %cst_5 = arith.constant dense<0.000000e+00> : vector<16x32xf32>
    %5 = tpu.matmul %4, %3, %cst_5 {dimension_numbers = #tpu.dot_dimension_numbers<[1], [0], [0], [1], [0, 0, 1, 1], [], []>} : vector<16x32xbf16>, vector<32x32xbf16>, vector<16x32xf32> -> vector<16x32xf32>
    %6 = arith.subf %2, %5 : vector<16x32xf32>
    %7 = arith.mulf %6, %6 : vector<16x32xf32>
    %8 = arith.truncf %7 : vector<16x32xf32> to vector<16x32xbf16>
    %cst_6 = arith.constant dense<0.000000e+00> : vector<16x32xf32>
    %9 = tpu.matmul %8, %3, %cst_6 {dimension_numbers = #tpu.dot_dimension_numbers<[1], [0], [0], [1], [0, 0, 1, 1], [], []>} : vector<16x32xbf16>, vector<32x32xbf16>, vector<16x32xf32> -> vector<16x32xf32>
    %cst_7 = arith.constant 9.99999974E-6 : f32
    %10 = vector.broadcast %cst_7 : f32 to vector<16x32xf32>
    %11 = arith.addf %9, %10 : vector<16x32xf32>
    %12 = math.rsqrt %11 : vector<16x32xf32>
    %13 = arith.mulf %6, %12 : vector<16x32xf32>
    %c0_8 = arith.constant 0 : index
    %c0_9 = arith.constant 0 : index
    %14 = vector.load %arg4[%c0_8, %c0_9] : memref<1x32xf32, #tpu.memory_space<vmem>>, vector<1x32xf32>
    %15 = vector.broadcast %14 : vector<1x32xf32> to vector<16x32xf32>
    %16 = arith.mulf %13, %15 : vector<16x32xf32>
    %c0_10 = arith.constant 0 : index
    %c0_11 = arith.constant 0 : index
    %17 = vector.load %arg5[%c0_10, %c0_11] : memref<1x32xf32, #tpu.memory_space<vmem>>, vector<1x32xf32>
    %18 = vector.broadcast %17 : vector<1x32xf32> to vector<16x32xf32>
    %19 = arith.addf %16, %18 : vector<16x32xf32>
    %20 = arith.truncf %19 : vector<16x32xf32> to vector<16x32xbf16>
    %c0_12 = arith.constant 0 : index
    %c0_13 = arith.constant 0 : index
    %21 = vector.load %arg6[%c0_12, %c0_13] : memref<16x32xbf16, #tpu.memory_space<vmem>>, vector<16x32xbf16>
    tpu.vector_store %arg6[%c0_12, %c0_13], %20 {strides = array<i32>} : memref<16x32xbf16, #tpu.memory_space<vmem>>, vector<16x32xbf16>,
    return
  }
  func.func @transform_0(%arg0: i32) -> (i32, i32) {
    %c0_i32 = arith.constant 0 : i32
    %c0_i32_0 = arith.constant 0 : i32
    return %arg0, %c0_i32 : i32, i32
  }
  func.func @transform_1(%arg0: i32) -> (i32, i32) {
    %c0_i32 = arith.constant 0 : i32
    %c0_i32_0 = arith.constant 0 : i32
    %c0_i32_1 = arith.constant 0 : i32
    return %c0_i32, %c0_i32_0 : i32, i32
  }
  func.func @transform_2(%arg0: i32) -> (i32, i32) {
    %c0_i32 = arith.constant 0 : i32
    %c0_i32_0 = arith.constant 0 : i32
    %c0_i32_1 = arith.constant 0 : i32
    return %c0_i32, %c0_i32_0 : i32, i32
  }
  func.func @transform_3(%arg0: i32) -> (i32, i32) {
    %c0_i32 = arith.constant 0 : i32
    %c0_i32_0 = arith.constant 0 : i32
    %c0_i32_1 = arith.constant 0 : i32
    return %c0_i32, %c0_i32_0 : i32, i32
  }
  func.func @transform_4(%arg0: i32) -> (i32, i32) {
    %c0_i32 = arith.constant 0 : i32
    %c0_i32_0 = arith.constant 0 : i32
    %c0_i32_1 = arith.constant 0 : i32
    return %c0_i32, %c0_i32_0 : i32, i32
  }
  func.func @transform_5(%arg0: i32) -> (i32, i32) {
    %c0_i32 = arith.constant 0 : i32
    %c0_i32_0 = arith.constant 0 : i32
    return %arg0, %c0_i32 : i32, i32
  }
}

</mosaic_0001>

<llo_original>
// kernel: tpu_custom_call.1
$region0: #{tpu_custom_call.1}
  #allocation0 [shape = 'u32[]', space=smem, size = 0x4, offset = 0x4, fixed_abs, tag = 'smem constant byte address 0x4 - core index']
  #allocation1 [shape = 'u32[72,128]{1,0:T(1,128)}', space=vmem, size = 0x9000, scoped, tag = 'internal scratch']
  %s0 = inlined_call_operand.hbm [shape: bf16[16,32], index: 0, kind: input, shape index: {}]
  %s1 = inlined_call_operand.hbm [shape: bf16[32,32], index: 1, kind: input, shape index: {}]
  %s2 = inlined_call_operand.hbm [shape: bf16[32,32], index: 2, kind: input, shape index: {}]
  %s3 = inlined_call_operand.vmem [shape: f32[1,32], index: 3, kind: input, shape index: {}]
  %s4 = inlined_call_operand.vmem [shape: f32[1,32], index: 4, kind: input, shape index: {}]
  %s5 = inlined_call_operand.hbm [shape: bf16[16,32], index: 5, kind: output, shape index: {}]
  %s6 = sld [smem:[#allocation0]]
  $region42: #{tpu_custom_call.1} parent=0
    _
  %s8 = ssub.s32 1, %s6
  %s9 = scalar_select 0, %s8, %s6
  $region1: #{tpu_custom_call.1} parent=0
    #allocation2 [shape = 'u8[4096]{0}', space=vmem, size = 0x1000, scoped, tag = 'input window, operand 0, single buffered']
    #allocation3 [shape = 's32[1]{0}', space=sflag, size = 0x4, scoped, tag = 'scoped memory for tpu_custom_call.1']
    #allocation4 [shape = 's32[1]{0}', space=sflag, size = 0x4, scoped, tag = 'scoped memory for tpu_custom_call.1']
    #allocation5 [shape = 'u8[8192]{0}', space=vmem, size = 0x2000, scoped, tag = 'input window, operand 1, single buffered']
    #allocation6 [shape = 's32[1]{0}', space=sflag, size = 0x4, scoped, tag = 'scoped memory for tpu_custom_call.1']
    #allocation7 [shape = 'u8[8192]{0}', space=vmem, size = 0x2000, scoped, tag = 'input window, operand 2, single buffered']
    #allocation8 [shape = 'u8[4096]{0}', space=vmem, size = 0x1000, scoped, tag = 'output window, operand 0, single buffered']
    %10 = vsyncpa [#allocation3], 0
    %11 = vsyncpa [#allocation6], 0
    %12 = vsyncpa [#allocation4], 0
    // Predicated region
    $region2: #{tpu_custom_call.1} parent=1 // pred_check
      _
    $region3: #{tpu_custom_call.1} parent=1 // pred_check_branch
      %14 = sbr.rel (0) target = $region5
    $region4: #{tpu_custom_call.1} parent=1 // pred_region
      %16 = vsyncadd [#allocation3], 0
      %s17 = sshll.u32 %s0, 4
      %s18 = int_to_ptr.hbm [resolvable:$true] %s17
      %s19 = sshll.u32 [#allocation2], 4
      %s20 = int_to_ptr.vmem [resolvable:$true] %s19
      %25 = dma.hbm_to_vmem [thread:$0]  %s18, 128, %s20, [#allocation3], 64, 64, 4
    $region5: #{tpu_custom_call.1} parent=1 // pred_fallthru
      _
    // Predicated region
    $region6: #{tpu_custom_call.1} parent=1 // pred_check
      _
    $region7: #{tpu_custom_call.1} parent=1 // pred_check_branch
      %27 = sbr.rel (0) target = $region9
    $region8: #{tpu_custom_call.1} parent=1 // pred_region
      %29 = vsyncadd [#allocation6], 0
      %s30 = sshll.u32 %s1, 4
      %s31 = int_to_ptr.hbm [resolvable:$true] %s30
      %s32 = sshll.u32 [#allocation5], 4
      %s33 = int_to_ptr.vmem [resolvable:$true] %s32
      %38 = dma.hbm_to_vmem [thread:$0]  %s31, 256, %s33, [#allocation6], 64, 64, 4
    $region9: #{tpu_custom_call.1} parent=1 // pred_fallthru
      _
    // Predicated region
    $region10: #{tpu_custom_call.1} parent=1 // pred_check
      _
    $region11: #{tpu_custom_call.1} parent=1 // pred_check_branch
      %40 = sbr.rel (0) target = $region13
    $region12: #{tpu_custom_call.1} parent=1 // pred_region
      %42 = vsyncadd [#allocation6], 0
      %s43 = sshll.u32 %s2, 4
      %s44 = int_to_ptr.hbm [resolvable:$true] %s43
      %s45 = sshll.u32 [#allocation7], 4
      %s46 = int_to_ptr.vmem [resolvable:$true] %s45
      %51 = dma.hbm_to_vmem [thread:$0]  %s44, 256, %s46, [#allocation6], 64, 64, 4
    $region13: #{tpu_custom_call.1} parent=1 // pred_fallthru
      _
    // Predicated region
    $region14: #{tpu_custom_call.1} parent=1 // pred_check
      _
    $region15: #{tpu_custom_call.1} parent=1 // pred_check_branch
      %53 = sbr.rel (0) target = $region17
    $region16: #{tpu_custom_call.1} parent=1 // pred_region
      _
    $region17: #{tpu_custom_call.1} parent=1 // pred_fallthru
      _
    // Predicated region
    $region18: #{tpu_custom_call.1} parent=1 // pred_check
      _
    $region19: #{tpu_custom_call.1} parent=1 // pred_check_branch
      %55 = sbr.rel (0) target = $region21
    $region20: #{tpu_custom_call.1} parent=1 // pred_region
      _
    $region21: #{tpu_custom_call.1} parent=1 // pred_fallthru
      _
    // Predicated region
    $region22: #{tpu_custom_call.1} parent=1 // pred_check
      _
    $region23: #{tpu_custom_call.1} parent=1 // pred_check_branch
      %57 = sbr.rel (0) target = $region25
    $region24: #{tpu_custom_call.1} parent=1 // pred_region
      %59 = dma.done [#allocation3], 128
    $region25: #{tpu_custom_call.1} parent=1 // pred_fallthru
      _
    // Predicated region
    $region26: #{tpu_custom_call.1} parent=1 // pred_check
      _
    $region27: #{tpu_custom_call.1} parent=1 // pred_check_branch
      %61 = sbr.rel (0) target = $region29
    $region28: #{tpu_custom_call.1} parent=1 // pred_region
      %63 = dma.done [#allocation6], 256
    $region29: #{tpu_custom_call.1} parent=1 // pred_fallthru
      _
    // Predicated region
    $region30: #{tpu_custom_call.1} parent=1 // pred_check
      _
    $region31: #{tpu_custom_call.1} parent=1 // pred_check_branch
      %65 = sbr.rel (0) target = $region33
    $region32: #{tpu_custom_call.1} parent=1 // pred_region
      %67 = dma.done [#allocation6], 256
    $region33: #{tpu_custom_call.1} parent=1 // pred_fallthru
      _
    %v69 = vld [vmem:[#allocation2] sm:$0xf]
    %v70 = vld [vmem:[#allocation2 + $0x4] sm:$0xf]
    %v71 = vld [vmem:[#allocation5] sm:$0xf]
    %v72 = vld [vmem:[#allocation5 + $0x4] sm:$0xf]
    %v73 = vld [vmem:[#allocation5 + $0x8] sm:$0xf]
    %v74 = vld [vmem:[#allocation5 + $0xc] sm:$0xf]
    %v77 = vunpack.c.l.b16 %v69
    %v78 = vunpack.c.l.b16 %v70
    %v79 = vpack.c.b16 %v78, %v77
    %v84 = vunpack.c.l.b16 %v71
    %v85 = vunpack.c.l.b16 %v72
    %v86 = vunpack.c.l.b16 %v73
    %v87 = vunpack.c.l.b16 %v74
    %v88 = vpack.c.b16 %v85, %v84
    %v89 = vpack.c.b16 %v87, %v86
    %vm92 = vcmask 261120
    %v94 = vsel %vm92, %v79, 0
    %96 = vmatpush.bf16.msra.mxu0 0
    %97 = vmatpush.bf16.msra.mxu0 0
    %98 = vmatpush.bf16.msra.mxu0 0
    %99 = vmatpush.bf16.msra.mxu0 0
    %100 = vmatpush.bf16.msra.mxu0 0
    %101 = vmatpush.bf16.msra.mxu0 0
    %102 = vmatpush.bf16.msra.mxu0 %v89
    %103 = vmatpush.bf16.msra.mxu0 %v88
    %104 = vmatmul.bf16.gmra.mxu0 %v94
    %v105 = vpop.f32.mrf.mxu0
    %v106 = vadd.f32 0.0, %v105
    %v107 = vpop.f32.mrf.mxu0
    %v108 = vadd.f32 0.0, %v107
    %109 = vdwg.mxu0
    %v110 = vld [vmem:[#allocation7] sm:$0xf]
    %v111 = vld [vmem:[#allocation7 + $0x4] sm:$0xf]
    %v112 = vld [vmem:[#allocation7 + $0x8] sm:$0xf]
    %v113 = vld [vmem:[#allocation7 + $0xc] sm:$0xf]
    %v114 = vpack.c.bf16 %v108, %v106
    %v119 = vunpack.c.l.b16 %v110
    %v120 = vunpack.c.l.b16 %v111
    %v121 = vunpack.c.l.b16 %v112
    %v122 = vunpack.c.l.b16 %v113
    %v123 = vpack.c.b16 %v120, %v119
    %v124 = vpack.c.b16 %v122, %v121
    %v128 = vsel %vm92, %v114, 0
    %130 = vmatpush.bf16.msra.mxu0 0
    %131 = vmatpush.bf16.msra.mxu0 0
    %132 = vmatpush.bf16.msra.mxu0 0
    %133 = vmatpush.bf16.msra.mxu0 0
    %134 = vmatpush.bf16.msra.mxu0 0
    %135 = vmatpush.bf16.msra.mxu0 0
    %136 = vmatpush.bf16.msra.mxu0 %v124
    %137 = vmatpush.bf16.msra.mxu0 %v123
    %138 = vmatmul.bf16.gmra.mxu0 %v128
    %v139 = vpop.f32.mrf.mxu0
    %v140 = vadd.f32 0.0, %v139
    %v141 = vpop.f32.mrf.mxu0
    %v142 = vadd.f32 0.0, %v141
    %143 = vdwg.mxu0
    %v144 = vsub.f32 %v106, %v140
    %v145 = vsub.f32 %v108, %v142
    %v146 = vmul.f32 %v144, %v144
    %v147 = vmul.f32 %v145, %v145
    %v148 = vpack.c.bf16 %v147, %v146
    %v150 = vsel %vm92, %v148, 0
    %152 = vmatpush.bf16.msra.mxu0 0
    %153 = vmatpush.bf16.msra.mxu0 0
    %154 = vmatpush.bf16.msra.mxu0 0
    %155 = vmatpush.bf16.msra.mxu0 0
    %156 = vmatpush.bf16.msra.mxu0 0
    %157 = vmatpush.bf16.msra.mxu0 0
    %158 = vmatpush.bf16.msra.mxu0 %v124
    %159 = vmatpush.bf16.msra.mxu0 %v123
    %160 = vmatmul.bf16.gmra.mxu0 %v150
    %v161 = vpop.f32.mrf.mxu0
    %v162 = vadd.f32 1e-05, %v161
    %v163 = vpop.f32.mrf.mxu0
    %v164 = vadd.f32 1e-05, %v163
    %165 = vdwg.mxu0
    %v166 = vrsqrt.pop %v162
    %v167 = vmul.f32 %v166, %v162
    %v168 = vmul.f32 %v167, %v166
    %v169 = vmul.f32 0.5, %v168
    %v170 = vsub.f32 1.5, %v169
    %v171 = vmul.f32 %v166, %v170
    %vm172 = vweird.f32 %v162
    %vm173 = vweird.f32 %v166
    %vm174 = vmor %vm172, %vm173
    %v175 = vsel %vm174, %v166, %v171
    %v176 = vrsqrt.pop %v164
    %v177 = vmul.f32 %v176, %v164
    %v178 = vmul.f32 %v177, %v176
    %v179 = vmul.f32 0.5, %v178
    %v180 = vsub.f32 1.5, %v179
    %v181 = vmul.f32 %v176, %v180
    %vm182 = vweird.f32 %v164
    %vm183 = vweird.f32 %v176
    %vm184 = vmor %vm182, %vm183
    %v185 = vsel %vm184, %v176, %v181
    %v186 = vmul.f32 %v144, %v175
    %v187 = vmul.f32 %v145, %v185
    %v188 = vld [vmem:[%s3] sm:$0x1]
    %v190 = vperm.slane %v188, 0
    %v192 = vmul.f32 %v186, %v190
    %v193 = vmul.f32 %v187, %v190
    %v194 = vld [vmem:[%s4] sm:$0x1]
    %v196 = vperm.slane %v194, 0
    %v198 = vadd.f32 %v192, %v196
    %v199 = vadd.f32 %v193, %v196
    %v200 = vpack.c.bf16 %v198, %v198
    %v201 = vpack.c.bf16 %v199, %v199
    %vm202 = vcmask 257024
    %203 = vst.msk [vmem:[#allocation8] sm:$0xf] %vm202, %v200
    %204 = vst.msk [vmem:[#allocation8 + $0x4] sm:$0xf] %vm202, %v201
    // Predicated region
    $region34: #{tpu_custom_call.1} parent=1 // pred_check
      _
    $region35: #{tpu_custom_call.1} parent=1 // pred_check_branch
      %206 = sbr.rel (0) target = $region37
    $region36: #{tpu_custom_call.1} parent=1 // pred_region
      %208 = vsyncadd [#allocation4], 0
      %s209 = sshll.u32 [#allocation8], 4
      %s210 = int_to_ptr.vmem [resolvable:$true] %s209
      %s211 = sshll.u32 %s5, 4
      %s212 = int_to_ptr.hbm [resolvable:$true] %s211
      %217 = dma.vmem_to_hbm [thread:$0]  %s210, 128, %s212, [#allocation4], 64, 64, 4
    $region37: #{tpu_custom_call.1} parent=1 // pred_fallthru
      _
    // Predicated region
    $region38: #{tpu_custom_call.1} parent=1 // pred_check
      _
    $region39: #{tpu_custom_call.1} parent=1 // pred_check_branch
      %219 = sbr.rel (0) target = $region41
    $region40: #{tpu_custom_call.1} parent=1 // pred_region
      %221 = dma.done [#allocation4], 128
    $region41: #{tpu_custom_call.1} parent=1 // pred_fallthru
      _
    %222 = vsyncpa [#allocation3], 1
    %223 = vsyncpa [#allocation6], 1
    %224 = vsyncpa [#allocation4], 1

</llo_original>
